<compile_context>
chip_gen: v5e
topology: v5e:2x2
jax: 0.10.0
libtpu: 0.0.40
codegen_flags: <defaults>
</compile_context>

<pallas_src>
import functools
import math

import jax
import jax.numpy as jnp
from jax import lax
from jax.experimental import pallas as pl
from jax.experimental.pallas import tpu as pltpu


def _cdiv(a, b):
    return -(-a // b)


def data_embedding_kernel(x_ref, w_ref, pe_ref, o_ref, *, roll_dtype):
    """One (batch-block, d-block): fused circular k=3 conv (single 2-D matmul) + pos. emb."""
    bb, L, C = x_ref.shape
    d_blk = o_ref.shape[-1]
    # Circular shifts along time on the XLU roll slot.  roll_dtype=f32 is the robust default
    # (packed-sublane bf16 rotate lowering is generation dependent); opt into bf16-native
    # rolls via roll_in_compute_dtype=True on v6e/v7x.
    x = x_ref[...].astype(roll_dtype)                      # (bb, L, C)
    x_prev = pltpu.roll(x, shift=1, axis=1)                # x[(t-1) mod L]
    x_next = pltpu.roll(x, shift=L - 1, axis=1)            # x[(t+1) mod L]
    # Fuse the three taps into one contraction of length 3C.
    x3 = jnp.concatenate([x_prev, x, x_next], axis=-1)     # (bb, L, 3C)
    # Single lane-dense 2-D MXU matmul with M = bb*L (reshape is layout-preserving for
    # L a multiple of the sublane count); f32 accumulation.
    x3 = x3.reshape(bb * L, 3 * C).astype(w_ref.dtype)
    y = jnp.dot(x3, w_ref[...], preferred_element_type=jnp.float32)   # (bb*L, d_blk)
    y = y.reshape(bb, L, d_blk) + pe_ref[...][None]        # PE add in f32
    # nn.Dropout is identity at eval/inference time.
    # TODO(synk): training-mode dropout would need pltpu.prng_seed + pltpu.prng_random_bits.
    o_ref[...] = y.astype(o_ref.dtype)


def _tpu_layout_params():
    """Returns (tensorcores_per_chip, per-block VMEM byte cap) from the local device kind."""
    kind = ""
    try:
        kind = jax.devices()[0].device_kind.lower()
    except Exception:
        pass
    if "v5 lite" in kind or "v5e" in kind or "v5litepod" in kind:
        return 1, 8 * 2**20      # 1 TC; modest tiles (16 MiB default scoped VMEM, we raise it)
    if "v6" in kind or "trillium" in kind:
        return 1, 12 * 2**20     # 1 TC; 128 MiB physical VMEM -> big tiles amortize DMA setup
    if "7" in kind:
        return 2, 5 * 2**20      # 2 TCs share 64 MiB physical / 32 MiB scoped VMEM
    return 2, 5 * 2**20          # conservative default (assume megacore)


def _choose_block_b(B, L, C, d_blk, in_bytes, out_bytes, num_tc, cap_bytes):
    """Pick batch rows per grid step: fill the per-block VMEM budget, balance across TCs."""
    # Per-batch-row VMEM footprint: double-buffered pipeline tiles (x in compute dtype,
    # out in out_dtype) plus in-kernel temporaries (x/x_prev/x_next/x3 rolls in f32 by
    # default, plus the f32 matmul result).
    row_bytes = L * (2 * C * in_bytes + 2 * d_blk * out_bytes
                     + 6 * C * 4 + d_blk * 4)
    bb = max(1, cap_bytes // max(row_bytes, 1))
    bb = min(bb, B)
    if num_tc >= 2 and B > bb:
        # Keep the grid tile count a multiple of the TC count for balanced megacore sharding.
        tiles = _cdiv(B, bb)
        tiles = _cdiv(tiles, num_tc) * num_tc
        bb = _cdiv(B, tiles)
    elif num_tc >= 2 and B >= num_tc:
        # Everything fits in one block, but give every TensorCore at least one tile.
        bb = min(bb, _cdiv(B, num_tc))
    # Single-TC chips (v5e/v6e): the grid is a serial loop -> just use the biggest block.
    return max(1, bb)


@functools.partial(
    jax.jit,
    static_argnames=("block_b", "block_d", "compute_dtype", "out_dtype",
                     "roll_in_compute_dtype"))
def data_embedding(x, w_kcd, pe, *, block_b=None, block_d=None,
                   compute_dtype=jnp.float32, out_dtype=None,
                   roll_in_compute_dtype=False):
    """x: [B, L, C], w_kcd: [3, C, D], pe: [L, D]  ->  [B, L, D] in out_dtype.

    compute_dtype=jnp.bfloat16 halves x/w HBM traffic and feeds the MXU at native bf16 rate;
    out_dtype defaults to compute_dtype (bf16 output halves the dominant HBM write stream).
    Accumulation and the PE add always stay float32.
    """
    B, L, C = x.shape
    K, _, D = w_kcd.shape
    if out_dtype is None:
        out_dtype = compute_dtype
    in_bytes = jnp.dtype(compute_dtype).itemsize
    out_bytes = jnp.dtype(out_dtype).itemsize
    roll_dtype = compute_dtype if roll_in_compute_dtype else jnp.float32

    x = x.astype(compute_dtype)
    # Taps stacked along the contraction axis: rows [0:C)=tap(t-1), [C:2C)=tap(t), [2C:3C)=tap(t+1).
    w_flat = w_kcd.reshape(K * C, D).astype(compute_dtype)
    pe = pe.astype(jnp.float32)

    num_tc, cap_bytes = _tpu_layout_params()
    if block_d is None:
        if D >= 512 and D % 128 == 0:
            block_d = 256 if D % 256 == 0 else 128    # lane-dense D tiles for big d_model
        else:
            block_d = D
    block_d = min(block_d, D)
    if block_b is None:
        block_b = _choose_block_b(B, L, C, block_d, in_bytes, out_bytes, num_tc, cap_bytes)

    grid = (_cdiv(B, block_b), _cdiv(D, block_d))

    # VMEM budget: double-buffered x/out tiles + resident w/pe + in-kernel f32 temporaries.
    vmem_need = (2 * block_b * L * C * in_bytes
                 + 2 * block_b * L * block_d * out_bytes
                 + 2 * K * C * block_d * in_bytes
                 + 2 * L * block_d * 4
                 + block_b * L * (6 * C * 4 + block_d * 4))
    vmem_limit = int(min(64 * 2**20, max(16 * 2**20, 1.5 * vmem_need)))

    cost = pl.CostEstimate(
        flops=2 * B * L * K * C * D,
        bytes_accessed=B * L * (C * in_bytes + D * out_bytes)
        + K * C * D * in_bytes + L * D * 4,
        transcendentals=0)

    kernel = functools.partial(data_embedding_kernel, roll_dtype=roll_dtype)

    return pl.pallas_call(
        kernel,
        out_shape=jax.ShapeDtypeStruct((B, L, D), out_dtype),
        grid=grid,
        in_specs=[
            pl.BlockSpec((block_b, L, C), lambda b, d: (b, 0, 0)),
            # Constant-in-b index maps -> w/pe stay VMEM-resident across batch tiles.
            pl.BlockSpec((K * C, block_d), lambda b, d: (0, d)),
            pl.BlockSpec((L, block_d), lambda b, d: (0, d)),
        ],
        out_specs=pl.BlockSpec((block_b, L, block_d), lambda b, d: (b, 0, d)),
        compiler_params=pltpu.CompilerParams(
            dimension_semantics=("parallel", "parallel"),
            vmem_limit_bytes=vmem_limit),
        cost_estimate=cost,
    )(x, w_flat, pe)


def make_positional_embedding(L, d_model):
    """Sin/cos positional encoding identical to the PyTorch PositionalEmbedding buffer."""
    position = jnp.arange(L, dtype=jnp.float32)[:, None]
    div_term = jnp.exp(jnp.arange(0, d_model, 2, dtype=jnp.float32)
                       * -(math.log(10000.0) / d_model))
    pe = jnp.zeros((L, d_model), jnp.float32)
    pe = pe.at[:, 0::2].set(jnp.sin(position * div_term))
    if d_model % 2 != 0:
        pe = pe.at[:, 1::2].set(jnp.cos(position * div_term[:-1]))
    else:
        pe = pe.at[:, 1::2].set(jnp.cos(position * div_term))
    return pe


def kaiming_conv1d_weight(key, d_model, c_in, ksize=3, a=0.01):
    """kaiming_normal_(mode='fan_in', nonlinearity='leaky_relu') for Conv1d weight."""
    fan_in = c_in * ksize
    gain = math.sqrt(2.0 / (1.0 + a * a))
    std = gain / math.sqrt(fan_in)
    return jax.random.normal(key, (d_model, c_in, ksize), jnp.float32) * std


if __name__ == "__main__":
    B, L, C, D = 2, 8, 4, 32

    key = jax.random.PRNGKey(0)
    kx, kw = jax.random.split(key)
    x = jax.random.normal(kx, (B, L, C), jnp.float32)
    w_torch = kaiming_conv1d_weight(kw, D, C)            # [D, C, 3]  (PyTorch layout)
    w_kcd = jnp.transpose(w_torch, (2, 1, 0))            # [3, C, D]  (kernel layout)
    pe = make_positional_embedding(L, D)                 # [L, D]

    # Default path: f32 compute, f32 output (exact PyTorch eval semantics).
    out = jax.block_until_ready(data_embedding(x, w_kcd, pe))

    # Independent reference: circular-pad + lax.conv (mirrors PyTorch Conv1d exactly).
    x_ncl = jnp.transpose(x, (0, 2, 1))                              # [B, C, L]
    x_pad = jnp.pad(x_ncl, ((0, 0), (0, 0), (1, 1)), mode="wrap")
    ref = lax.conv_general_dilated(
        x_pad, w_torch, window_strides=(1,), padding="VALID",
        dimension_numbers=("NCH", "OIH", "NCH"))                     # [B, D, L]
    ref = jnp.transpose(ref, (0, 2, 1)) + pe[None]                   # [B, L, D]

    assert out.shape == (B, L, D) and out.dtype == jnp.float32
    assert jnp.allclose(out, ref, atol=1e-4, rtol=1e-4)

    # Recommended production path on v5e/v6e/v7x: bf16 inputs AND bf16 output
    # (the f32 output was ~95% of HBM traffic); accumulation stays f32 inside the kernel.
    out_bf16 = jax.block_until_ready(
        data_embedding(x, w_kcd, pe, compute_dtype=jnp.bfloat16))
    assert out_bf16.dtype == jnp.bfloat16
    assert jnp.allclose(out_bf16.astype(jnp.float32), ref, atol=8e-2, rtol=8e-2)

    print("KERNEL_OK")
</pallas_src>

<mosaic_0001>
module attributes {stable_mosaic.version = 11 : i64} {
  func.func @data_embedding_kernel(%arg0: i32, %arg1: i32, %arg2: memref<1x8x4xf32, #tpu.memory_space<vmem>>, %arg3: memref<12x32xf32, #tpu.memory_space<vmem>>, %arg4: memref<8x32xf32, #tpu.memory_space<vmem>>, %arg5: memref<1x8x32xf32, #tpu.memory_space<vmem>>) attributes {dimension_semantics = [#tpu.dimension_semantics<parallel>, #tpu.dimension_semantics<parallel>], iteration_bounds = array<i64: 2, 1>, scalar_prefetch = 0 : i64, scratch_operands = 0 : i64, tpu.core_type = #tpu.core_type<tc>, window_params = [{transform_indices = @transform_0, window_bounds = array<i64: 1, 8, 4>}, {transform_indices = @transform_1, window_bounds = array<i64: 12, 32>}, {transform_indices = @transform_2, window_bounds = array<i64: 8, 32>}, {transform_indices = @transform_3, window_bounds = array<i64: 1, 8, 32>}]} {
    %c0 = arith.constant 0 : index
    %c0_0 = arith.constant 0 : index
    %c0_1 = arith.constant 0 : index
    %0 = vector.load %arg2[%c0, %c0_0, %c0_1] : memref<1x8x4xf32, #tpu.memory_space<vmem>>, vector<1x8x4xf32>
    %c1_i32 = arith.constant 1 : i32
    %1 = tpu.dynamic_rotate %0 by %c1_i32 dim 1 : vector<1x8x4xf32>, i32 -> vector<1x8x4xf32>
    %c7_i32 = arith.constant 7 : i32
    %2 = tpu.dynamic_rotate %0 by %c7_i32 dim 1 : vector<1x8x4xf32>, i32 -> vector<1x8x4xf32>
    %3 = tpu.concatenate %1, %0, %2 in 2 : vector<1x8x4xf32>, vector<1x8x4xf32>, vector<1x8x4xf32> -> vector<1x8x12xf32>
    %4 = vector.shape_cast %3 : vector<1x8x12xf32> to vector<8x12xf32>
    %c0_2 = arith.constant 0 : index
    %c0_3 = arith.constant 0 : index
    %5 = vector.load %arg3[%c0_2, %c0_3] : memref<12x32xf32, #tpu.memory_space<vmem>>, vector<12x32xf32>
    %cst = arith.constant dense<0.000000e+00> : vector<8x32xf32>
    %6 = tpu.matmul %4, %5, %cst {dimension_numbers = #tpu.dot_dimension_numbers<[1], [0], [0], [1], [0, 0, 1, 1], [], []>} : vector<8x12xf32>, vector<12x32xf32>, vector<8x32xf32> -> vector<8x32xf32>
    %7 = vector.shape_cast %6 : vector<8x32xf32> to vector<1x8x32xf32>
    %c0_4 = arith.constant 0 : index
    %c0_5 = arith.constant 0 : index
    %8 = vector.load %arg4[%c0_4, %c0_5] : memref<8x32xf32, #tpu.memory_space<vmem>>, vector<8x32xf32>
    %9 = vector.shape_cast %8 : vector<8x32xf32> to vector<1x8x32xf32>
    %10 = arith.addf %7, %9 : vector<1x8x32xf32>
    %c0_6 = arith.constant 0 : index
    %c0_7 = arith.constant 0 : index
    %c0_8 = arith.constant 0 : index
    %11 = vector.load %arg5[%c0_6, %c0_7, %c0_8] : memref<1x8x32xf32, #tpu.memory_space<vmem>>, vector<1x8x32xf32>
    tpu.vector_store %arg5[%c0_6, %c0_7, %c0_8], %10 {strides = array<i32>} : memref<1x8x32xf32, #tpu.memory_space<vmem>>, vector<1x8x32xf32>,
    return
  }
  func.func @transform_0(%arg0: i32, %arg1: i32) -> (i32, i32, i32) {
    %c0_i32 = arith.constant 0 : i32
    %c0_i32_0 = arith.constant 0 : i32
    %c0_i32_1 = arith.constant 0 : i32
    return %arg0, %c0_i32, %c0_i32_0 : i32, i32, i32
  }
  func.func @transform_1(%arg0: i32, %arg1: i32) -> (i32, i32) {
    %c0_i32 = arith.constant 0 : i32
    %c0_i32_0 = arith.constant 0 : i32
    return %c0_i32, %arg1 : i32, i32
  }
  func.func @transform_2(%arg0: i32, %arg1: i32) -> (i32, i32) {
    %c0_i32 = arith.constant 0 : i32
    %c0_i32_0 = arith.constant 0 : i32
    return %c0_i32, %arg1 : i32, i32
  }
  func.func @transform_3(%arg0: i32, %arg1: i32) -> (i32, i32, i32) {
    %c0_i32 = arith.constant 0 : i32
    %c0_i32_0 = arith.constant 0 : i32
    return %arg0, %c0_i32, %arg1 : i32, i32, i32
  }
}

</mosaic_0001>

<llo_original>
// kernel: data_embedding.1
$region0: #{data_embedding.1}
  #allocation0 [shape = 'u32[]', space=smem, size = 0x4, offset = 0x4, fixed_abs, tag = 'smem constant byte address 0x4 - core index']
  #allocation1 [shape = 'u32[72,128]{1,0:T(1,128)}', space=vmem, size = 0x9000, scoped, tag = 'internal scratch']
  %s0 = inlined_call_operand.vmem [shape: f32[2,8,4], index: 0, kind: input, shape index: {}]
  %s1 = inlined_call_operand.vmem [shape: f32[12,32], index: 1, kind: input, shape index: {}]
  %s2 = inlined_call_operand.vmem [shape: f32[8,32], index: 2, kind: input, shape index: {}]
  %s3 = inlined_call_operand.hbm [shape: f32[2,8,32], index: 3, kind: output, shape index: {}]
  %s4 = sld [smem:[#allocation0]]
  $region45: #{data_embedding.1} parent=0
    _
  %s6 = ssub.s32 1, %s4
  %s7 = scalar_select 0, %s6, %s4
  $region1: #{data_embedding.1} parent=0
    #allocation2 [shape = 'u8[8192]{0}', space=vmem, size = 0x2000, scoped, tag = 'output window, operand 0']
    #allocation3 [shape = 's32[2]{0}', space=sflag, size = 0x8, scoped, tag = 'scoped memory for data_embedding.1']
    %8 = vsyncpa [#allocation3], 0
    %s9 = scalar_lea.sflag [#allocation3], 1
    %10 = vsyncpa %s9, 0
    loop: start=0, step=1, limit=4
    $region2: #{data_embedding.1} parent=1 // loop_pre_header
      _
    $region3: #{data_embedding.1} parent=1 // loop_header
      %s12 = sphi 0, %s16
      %p13 = scmp.ge.s32.totalorder %s12, 4
      %s19 = sphi 0, %s31
      %s20 = sphi 0, %s27
      %s21 = sphi 0, %s19
      %s22 = sphi 0, %s20
      %s23 = sphi 0, %s21
      %s24 = sphi 0, %s22
      %s34 = sphi 0, %s36
      %s37 = sphi 0, %s34
      %s38 = sphi 0, %s37
      %s54 = sphi 0, %s38
      %s60 = sphi 0, %s62
      %s63 = sphi 0, %s60
      %s64 = sphi 0, %s63
      %s80 = sphi 0, %s64
      %s86 = sphi 0, %s88
      %s89 = sphi 0, %s86
      %s90 = sphi 0, %s89
      %s106 = sphi 0, %s90
      %s114 = sphi 0, %s116
      %s117 = sphi 0, %s114
      %s118 = sphi 0, %s117
      %s134 = sphi 0, %s118
    $region4: #{data_embedding.1} parent=1 // loop_header_branch
      %15 = sbr.rel (%p13) target = $region8
    $region5: #{data_embedding.1} parent=1 // loop_body
      %s17 = ssub.s32 %s12, 1
      %s18 = ssub.s32 %s12, 2
      %s25 = sadd.s32 1, %s20
      %p26 = scmp.ge.s32.totalorder %s25, 1
      %s27 = scalar_select %p26, 0, %s25
      %s28 = sadd.s32 1, %s19
      %s29 = scalar_select %p26, %s28, %s19
      %p30 = scmp.ge.s32.totalorder %s29, 2
      %s31 = scalar_select %p30, 0, %s29
      %s32 = ssub.s32 %s19, %s31
      %p33 = scmp.eq.s32.totalorder %s32, 0
      %s35 = sadd.s32 %s34, 1
      %s36 = scalar_select %p33, %s34, %s35
      %p39 = pneg %p33
      %p40 = scmp.eq.s32.totalorder %s12, 1
      %p41 = por %p39, %p40
      %p42 = scmp.ne.s32.totalorder %s34, %s37
      %p43 = scmp.eq.s32.totalorder %s12, 0
      %p44 = por %p42, %p43
      %p45 = scmp.ne.s32.totalorder %s34, %s37
      %p46 = scmp.eq.s32.totalorder %s17, 1
      %p47 = por %p45, %p46
      %p48 = scmp.ne.s32.totalorder %s37, %s38
      %p49 = scmp.eq.s32.totalorder %s17, 0
      %p50 = por %p48, %p49
      %p51 = scmp.ne.s32.totalorder %s37, %s38
      %p52 = scmp.eq.s32.totalorder %s18, 1
      %p53 = por %p51, %p52
      %p55 = scmp.ne.s32.totalorder %s38, %s54
      %p56 = scmp.eq.s32.totalorder %s18, 0
      %p57 = por %p55, %p56
      %s58 = ssub.s32 %s20, %s27
      %p59 = scmp.eq.s32.totalorder %s58, 0
      %s61 = sadd.s32 %s60, 1
      %s62 = scalar_select %p59, %s60, %s61
      %p65 = pneg %p59
      %p66 = scmp.eq.s32.totalorder %s12, 1
      %p67 = por %p65, %p66
      %p68 = scmp.ne.s32.totalorder %s60, %s63
      %p69 = scmp.eq.s32.totalorder %s12, 0
      %p70 = por %p68, %p69
      %p71 = scmp.ne.s32.totalorder %s60, %s63
      %p72 = scmp.eq.s32.totalorder %s17, 1
      %p73 = por %p71, %p72
      %p74 = scmp.ne.s32.totalorder %s63, %s64
      %p75 = scmp.eq.s32.totalorder %s17, 0
      %p76 = por %p74, %p75
      %p77 = scmp.ne.s32.totalorder %s63, %s64
      %p78 = scmp.eq.s32.totalorder %s18, 1
      %p79 = por %p77, %p78
      %p81 = scmp.ne.s32.totalorder %s64, %s80
      %p82 = scmp.eq.s32.totalorder %s18, 0
      %p83 = por %p81, %p82
      %s84 = ssub.s32 %s20, %s27
      %p85 = scmp.eq.s32.totalorder %s84, 0
      %s87 = sadd.s32 %s86, 1
      %s88 = scalar_select %p85, %s86, %s87
      %p91 = pneg %p85
      %p92 = scmp.eq.s32.totalorder %s12, 1
      %p93 = por %p91, %p92
      %p94 = scmp.ne.s32.totalorder %s86, %s89
      %p95 = scmp.eq.s32.totalorder %s12, 0
      %p96 = por %p94, %p95
      %p97 = scmp.ne.s32.totalorder %s86, %s89
      %p98 = scmp.eq.s32.totalorder %s17, 1
      %p99 = por %p97, %p98
      %p100 = scmp.ne.s32.totalorder %s89, %s90
      %p101 = scmp.eq.s32.totalorder %s17, 0
      %p102 = por %p100, %p101
      %p103 = scmp.ne.s32.totalorder %s89, %s90
      %p104 = scmp.eq.s32.totalorder %s18, 1
      %p105 = por %p103, %p104
      %p107 = scmp.ne.s32.totalorder %s90, %s106
      %p108 = scmp.eq.s32.totalorder %s18, 0
      %p109 = por %p107, %p108
      %s110 = ssub.s32 %s19, %s31
      %s111 = ssub.s32 %s20, %s27
      %s112 = sor.u32 %s110, %s111
      %p113 = scmp.eq.s32.totalorder %s112, 0
      %s115 = sadd.s32 %s114, 1
      %s116 = scalar_select %p113, %s114, %s115
      %p119 = pneg %p113
      %p120 = scmp.eq.s32.totalorder %s12, 1
      %p121 = por %p119, %p120
      %p122 = scmp.ne.s32.totalorder %s114, %s117
      %p123 = scmp.eq.s32.totalorder %s12, 0
      %p124 = por %p122, %p123
      %p125 = scmp.ne.s32.totalorder %s114, %s117
      %p126 = scmp.eq.s32.totalorder %s17, 1
      %p127 = por %p125, %p126
      %p128 = scmp.ne.s32.totalorder %s117, %s118
      %p129 = scmp.eq.s32.totalorder %s17, 0
      %p130 = por %p128, %p129
      %p131 = scmp.ne.s32.totalorder %s117, %s118
      %p132 = scmp.eq.s32.totalorder %s18, 1
      %p133 = por %p131, %p132
      %p135 = scmp.ne.s32.totalorder %s118, %s134
      %p136 = scmp.eq.s32.totalorder %s18, 0
      %p137 = por %p135, %p136
      %p138 = scmp.le.s32.totalorder 1, %s12
      %p139 = scmp.lt.s32.totalorder %s12, 3
      %p140 = pnand %p138, %p139
      %p141 = pneg %p140
      // Predicated region
      $region9: #{data_embedding.1} parent=5 // pred_check
        _
      $region10: #{data_embedding.1} parent=5 // pred_check_branch
        %143 = sbr.rel (%p140) target = $region12
      $region11: #{data_embedding.1} parent=5 // pred_region
        %s144 = ssub.s32 %s12, 1
        // Predicated region
        $region13: #{data_embedding.1} parent=11 // pred_check
          %p145 = pneg %p76
        $region14: #{data_embedding.1} parent=11 // pred_check_branch
          %147 = sbr.rel (%p145) target = $region16
        $region15: #{data_embedding.1} parent=11 // pred_region
          %p148 = scmp.lt.s32.totalorder %s22, 0
          %s149 = scalar_select %p148, %s22, 0
          %s150 = smul.addr %s149, 8
          %s151 = scalar_lea.vmem %s1, %s150
        $region16: #{data_embedding.1} parent=11 // pred_fallthru
          _
        // Predicated region
        $region17: #{data_embedding.1} parent=11 // pred_check
          %p152 = pneg %p102
        $region18: #{data_embedding.1} parent=11 // pred_check_branch
          %154 = sbr.rel (%p152) target = $region20
        $region19: #{data_embedding.1} parent=11 // pred_region
          %p155 = scmp.lt.s32.totalorder %s22, 0
          %s156 = scalar_select %p155, %s22, 0
          %s157 = smul.addr %s156, 8
          %s158 = scalar_lea.vmem %s2, %s157
        $region20: #{data_embedding.1} parent=11 // pred_fallthru
          _
      $region12: #{data_embedding.1} parent=5 // pred_fallthru
        _
      %p159 = scmp.lt.s32.totalorder %s12, 2
      // Predicated region
      $region21: #{data_embedding.1} parent=5 // pred_check
        %p160 = pneg %p159
      $region22: #{data_embedding.1} parent=5 // pred_check_branch
        %162 = sbr.rel (%p160) target = $region24
      $region23: #{data_embedding.1} parent=5 // pred_region
        // Predicated region
        $region25: #{data_embedding.1} parent=23 // pred_check
          %p163 = pneg %p44
        $region26: #{data_embedding.1} parent=23 // pred_check_branch
          %165 = sbr.rel (%p163) target = $region28
        $region27: #{data_embedding.1} parent=23 // pred_region
          %p166 = scmp.lt.s32.totalorder %s19, 1
          %s167 = scalar_select %p166, %s19, 1
          %s168 = smul.addr %s167, 8
          %s169 = scalar_lea.vmem %s0, %s168
        $region28: #{data_embedding.1} parent=23 // pred_fallthru
          _
      $region24: #{data_embedding.1} parent=5 // pred_fallthru
        _
      %p170 = scmp.le.s32.totalorder 1, %s12
      %p171 = scmp.lt.s32.totalorder %s12, 3
      %p172 = pnand %p170, %p171
      %p173 = pneg %p172
      // Predicated region
      $region29: #{data_embedding.1} parent=5 // pred_check
        _
      $region30: #{data_embedding.1} parent=5 // pred_check_branch
        %175 = sbr.rel (%p172) target = $region32
      $region31: #{data_embedding.1} parent=5 // pred_region
        %s176 = ssub.s32 %s12, 1
        %p177 = scmp.lt.s32.totalorder %s21, 1
        %s178 = scalar_select %p177, %s21, 1
        %s179 = smul.addr %s178, 8
        %s180 = scalar_lea.vmem %s0, %s179
        %p181 = pneg %p50
        %p182 = pneg %p47
        %p183 = scmp.lt.s32.totalorder %s22, 0
        %s184 = scalar_select %p183, %s22, 0
        %s185 = smul.addr %s184, 8
        %s186 = scalar_lea.vmem %s1, %s185
        %p187 = pneg %p76
        %p188 = pneg %p73
        %p189 = scmp.lt.s32.totalorder %s22, 0
        %s190 = scalar_select %p189, %s22, 0
        %s191 = smul.addr %s190, 8
        %s192 = scalar_lea.vmem %s2, %s191
        %p193 = pneg %p102
        %p194 = pneg %p99
        %p195 = pneg %p130
        %p196 = pneg %p127
        %s197 = sand.u32 %s117, 1
        %s198 = scalar_lea.sflag [#allocation3], %s197
        %s199 = sand.u32 %s117, 1
        %s200 = smul.addr %s199, 8
        %s201 = scalar_lea.vmem [#allocation2], %s200
        %p202 = scmp.lt.s32.totalorder %s21, 1
        %s203 = scalar_select %p202, %s21, 1
        %s204 = smul.addr %s203, 8
        %s205 = scalar_lea.vmem %s0, %s204
        %p206 = scmp.lt.s32.totalorder %s22, 0
        %s207 = scalar_select %p206, %s22, 0
        %s208 = smul.addr %s207, 8
        %s209 = scalar_lea.vmem %s1, %s208
        %p210 = scmp.lt.s32.totalorder %s22, 0
        %s211 = scalar_select %p210, %s22, 0
        %s212 = smul.addr %s211, 8
        %s213 = scalar_lea.vmem %s2, %s212
        %v214 = vld [vmem:[%s205] sm:$0xff]
        %v215 = vrot.slane %v214, 7
        %v216 = vrot.slane %v214, 1
        %218 = vrot.lane.b32.xlu0 %v214, 4
        %v219 = vpop.permute.xlu0 %218
        %222 = vrot.lane.b32.xlu0 %v216, 8
        %v223 = vpop.permute.xlu0 %222
        %vm225 = vcmask 31744
        %v226 = vsel %vm225, %v215, %v219
        %vm227 = vcmask 64512
        %v228 = vsel %vm227, %v226, %v223
        %v229 = vld [vmem:[%s209] sm:$0xff]
        %v230 = vld [vmem:[%s209 + $0x8] sm:$0xf]
        %vm231 = vcmask 97280
        %v233 = vsel %vm231, %v228, 0
        %vm235 = vcmask 1043456
        %v237 = vsel %vm235, %v230, 0
        %239 = vmatpush.msra.mxu0 0.0
        %240 = vmatpush.msra.mxu0 0.0
        %241 = vmatpush.msra.mxu0 0.0
        %242 = vmatpush.msra.mxu0 0.0
        %243 = vmatpush.msra.mxu0 0.0
        %244 = vmatpush.msra.mxu0 0.0
        %245 = vmatpush.msra.mxu0 0.0
        %246 = vmatpush.msra.mxu0 0.0
        %247 = vmatpush.msra.mxu0 0.0
        %248 = vmatpush.msra.mxu0 0.0
        %249 = vmatpush.msra.mxu0 0.0
        %250 = vmatpush.msra.mxu0 0.0
        %251 = vmatpush.msra.mxu0 0.0
        %252 = vmatpush.msra.mxu0 0.0
        %253 = vmatpush.msra.mxu0 %v237
        %254 = vmatpush.msra.mxu0 %v229
        %255 = vmatmul.f32.gmra.mxu0 %v233
        %v256 = vpop.f32.mrf.mxu0
        %v257 = vadd.f32 0.0, %v256
        %258 = vdwg.mxu0
        %v259 = vld [vmem:[%s213] sm:$0xff]
        %v260 = vadd.f32 %v257, %v259
        %vm261 = vcmask 261120
        %262 = vst.msk [vmem:[%s201] sm:$0xff] %vm261, %v260
        %s263 = sand.u32 %s117, 1
        %s264 = scalar_lea.sflag [#allocation3], %s263
        %s265 = sand.u32 %s117, 1
        %s266 = smul.addr %s265, 8
        %s267 = scalar_lea.vmem [#allocation2], %s266
        // Predicated region
        $region33: #{data_embedding.1} parent=31 // pred_check
          %p268 = pneg %p127
        $region34: #{data_embedding.1} parent=31 // pred_check_branch
          %270 = sbr.rel (%p268) target = $region36
        $region35: #{data_embedding.1} parent=31 // pred_region
          %272 = vsyncadd %s264, 0
          %s273 = sadd.s32 %s22, %s21
          %s274 = smul.addr %s273, 8
          %s275 = scalar_lea.hbm %s3, %s274
          %s277 = sshll.u32 %s267, 4
          %s278 = int_to_ptr.vmem [resolvable:$true] %s277
          %s279 = sshll.u32 %s275, 4
          %s280 = int_to_ptr.hbm [resolvable:$true] %s279
          %282 = dma.vmem_to_hbm [thread:$0]  %s278, 128, %s280, %s264
        $region36: #{data_embedding.1} parent=31 // pred_fallthru
          _
      $region32: #{data_embedding.1} parent=5 // pred_fallthru
        _
      %p283 = scmp.le.s32.totalorder 2, %s12
      // Predicated region
      $region37: #{data_embedding.1} parent=5 // pred_check
        %p284 = pneg %p283
      $region38: #{data_embedding.1} parent=5 // pred_check_branch
        %286 = sbr.rel (%p284) target = $region40
      $region39: #{data_embedding.1} parent=5 // pred_region
        %s287 = ssub.s32 %s12, 2
        // Predicated region
        $region41: #{data_embedding.1} parent=39 // pred_check
          %p288 = pneg %p133
        $region42: #{data_embedding.1} parent=39 // pred_check_branch
          %290 = sbr.rel (%p288) target = $region44
        $region43: #{data_embedding.1} parent=39 // pred_region
          %s291 = sand.u32 %s118, 1
          %s292 = scalar_lea.sflag [#allocation3], %s291
          %s293 = sand.u32 %s118, 1
          %s294 = smul.addr %s293, 8
          %s295 = scalar_lea.vmem [#allocation2], %s294
          %297 = dma.done %s292, 128
        $region44: #{data_embedding.1} parent=39 // pred_fallthru
          _
      $region40: #{data_embedding.1} parent=5 // pred_fallthru
        _
    $region6: #{data_embedding.1} parent=1 // loop_footer
      %s16 = sadd.s32 1, %s12
    $region7: #{data_embedding.1} parent=1 // loop_footer_branch
      %11 = sbr.rel target = $region3
    $region8: #{data_embedding.1} parent=1 // loop_exit
      _
    %298 = vsyncpa [#allocation3], 1
    %s299 = scalar_lea.sflag [#allocation3], 1
    %300 = vsyncpa %s299, 1

</llo_original>
